<compile_context>
chip_gen: v5e
topology: v5e:2x2
jax: 0.10.0
libtpu: 0.0.40
codegen_flags: <defaults>
</compile_context>

<pallas_src>
import functools

import jax
import jax.numpy as jnp
from jax import lax
from jax.experimental import pallas as pl
from jax.experimental.pallas import tpu as pltpu


def _round_up(x: int, m: int) -> int:
    return ((x + m - 1) // m) * m


def _big_vmem_generation() -> bool:
    """True on generations with the 32 MiB scoped-VMEM default (v6e/v7x)."""
    try:
        kind = jax.devices()[0].device_kind.lower()
    except Exception:
        return False
    return ("v6" in kind) or ("v7" in kind)


def _pick_block_rows(n: int, d: int, itemsize: int, target_bytes: int) -> int:
    """Row-tile size: ~target_bytes per input tile, multiple of 16, <= N."""
    bn = target_bytes // max(1, d * itemsize)
    bn = max(16, (bn // 16) * 16)
    bn = min(bn, _round_up(n, 16))
    return int(bn)


# --------------------------------------------------------------------------
# Kernels
# --------------------------------------------------------------------------
def _fused_kernel(x_ref, o_ref, *, mode: str, scale: float, n_rows: int):
    """Single-call path: whole array resident in VMEM."""
    x = x_ref[...].astype(jnp.float32)
    col_mean = jnp.sum(x, axis=0, keepdims=True) * jnp.float32(1.0 / n_rows)

    if mode == "PN":
        xc = x - col_mean                                       # stable: center first
        mean_sq = jnp.sum(xc * xc, keepdims=True) * jnp.float32(1.0 / n_rows)
        out = xc * (scale * lax.rsqrt(1e-6 + mean_sq))          # EUP rsqrt
    elif mode == "PN-SI":
        xc = x - col_mean
        row_sq = jnp.sum(xc * xc, axis=1, keepdims=True)        # (N, 1)
        out = xc * (scale * lax.rsqrt(1e-6 + row_sq))
    else:  # 'PN-SCS'
        row_sq = jnp.sum(x * x, axis=1, keepdims=True)
        out = x * (scale * lax.rsqrt(1e-6 + row_sq)) - col_mean

    o_ref[...] = out.astype(o_ref.dtype)


def _stats_kernel(x_ref, colsum_ref, colsumsq_ref, *, need_sumsq: bool,
                  n_rows: int, block_rows: int, tiles_per_core: int):
    """Pass 1: per-column sums (+ per-column sums of squares for 'PN').

    Grid is (2, tiles_per_core): axis 0 is a "parallel" core-split producing
    one partial (1, D) row each; axis 1 ("arbitrary") streams row tiles.
    Rows past N (ragged last tile / clamped duplicate tiles) are masked to 0.
    """
    c = pl.program_id(0)
    i = pl.program_id(1)

    @pl.when(i == 0)
    def _init():
        colsum_ref[...] = jnp.zeros_like(colsum_ref)
        colsumsq_ref[...] = jnp.zeros_like(colsumsq_ref)

    tile_idx = c * tiles_per_core + i
    rows_left = n_rows - tile_idx * block_rows          # may be <= 0
    x = x_ref[...].astype(jnp.float32)
    mask = lax.broadcasted_iota(jnp.int32, x.shape, 0) < rows_left
    x = jnp.where(mask, x, 0.0)

    colsum_ref[...] += jnp.sum(x, axis=0, keepdims=True)        # (1, D)
    if need_sumsq:
        colsumsq_ref[...] += jnp.sum(x * x, axis=0, keepdims=True)


def _pn_apply_kernel(x_ref, cm_ref, inv_ref, o_ref):
    """Pass 2 ('PN'): out = (x - col_mean) * inv   with inv a (1,1) scalar."""
    x = x_ref[...].astype(jnp.float32)
    o_ref[...] = ((x - cm_ref[...]) * inv_ref[...]).astype(o_ref.dtype)


def _rownorm_apply_kernel(x_ref, cm_ref, o_ref, *, mode: str, scale: float):
    """Pass 2 ('PN-SI' / 'PN-SCS'): per-row rsqrt scaling."""
    x = x_ref[...].astype(jnp.float32)
    cm = cm_ref[...]
    if mode == "PN-SI":
        xc = x - cm
        row_sq = jnp.sum(xc * xc, axis=1, keepdims=True)        # (bn, 1)
        out = xc * (scale * lax.rsqrt(1e-6 + row_sq))
    else:  # 'PN-SCS'
        row_sq = jnp.sum(x * x, axis=1, keepdims=True)
        out = x * (scale * lax.rsqrt(1e-6 + row_sq)) - cm
    o_ref[...] = out.astype(o_ref.dtype)


# --------------------------------------------------------------------------
# Wrapper
# --------------------------------------------------------------------------
def pairnorm(x: jax.Array, mode: str = "PN", scale: float = 1.0,
             block_rows: int | None = None,
             allow_fused: bool = True) -> jax.Array:
    """Pallas implementation of PairNormNorm.forward."""
    assert mode in ["None", "PN", "PN-SI", "PN-SCS"]
    if mode == "None":
        return x  # identity, no kernel launch

    n, d = x.shape
    itemsize = jnp.dtype(x.dtype).itemsize
    scale = float(scale)
    big_vmem = _big_vmem_generation()
    target_bytes = (4 if big_vmem else 2) * 1024 * 1024

    # ---------------- fused single-call path (VMEM-resident input) ----------
    f32_bytes = n * d * 4
    fused_limit = (4 if big_vmem else 2) * 1024 * 1024
    if allow_fused and block_rows is None and f32_bytes <= fused_limit:
        return pl.pallas_call(
            functools.partial(_fused_kernel, mode=mode, scale=scale, n_rows=n),
            out_shape=jax.ShapeDtypeStruct((n, d), x.dtype),
            in_specs=[pl.BlockSpec(memory_space=pltpu.MemorySpace.VMEM)],
            out_specs=pl.BlockSpec(memory_space=pltpu.MemorySpace.VMEM),
            cost_estimate=pl.CostEstimate(
                flops=6 * n * d, transcendentals=n,
                bytes_accessed=2 * n * d * itemsize),
        )(x)

    # ---------------- tiled two-pass path -----------------------------------
    if block_rows is None:
        bn = _pick_block_rows(n, d, itemsize, target_bytes)
    else:
        bn = min(_round_up(max(16, int(block_rows)), 16), _round_up(n, 16))

    num_tiles = pl.cdiv(n, bn)
    tpc = pl.cdiv(num_tiles, 2)            # tiles per core-slot (2-way split)

    def x_stats_map(c, i):
        # Clamp invalid grid points to the last valid tile; their rows are
        # fully masked inside the kernel, so the duplicate read contributes 0.
        return (jnp.minimum(c * tpc + i, num_tiles - 1), 0)

    need_sumsq = (mode == "PN")

    # ----- pass 1: global statistics (partial per core-slot) -----
    colsum_p, colsumsq_p = pl.pallas_call(
        functools.partial(_stats_kernel, need_sumsq=need_sumsq, n_rows=n,
                          block_rows=bn, tiles_per_core=tpc),
        grid=(2, tpc),
        in_specs=[pl.BlockSpec((bn, d), x_stats_map)],
        out_specs=(pl.BlockSpec((1, d), lambda c, i: (c, 0)),
                   pl.BlockSpec((1, d), lambda c, i: (c, 0))),
        out_shape=(jax.ShapeDtypeStruct((2, d), jnp.float32),
                   jax.ShapeDtypeStruct((2, d), jnp.float32)),
        compiler_params=pltpu.CompilerParams(
            dimension_semantics=("parallel", "arbitrary")),
        cost_estimate=pl.CostEstimate(
            flops=(5 if need_sumsq else 3) * n * d, transcendentals=0,
            bytes_accessed=n * d * itemsize + 16 * d),
    )(x)

    # Tiny XLA epilogue on (2, D): combine partials, form col_mean (+ scalar).
    col_mean = (colsum_p[0:1] + colsum_p[1:2]) * (1.0 / n)      # (1, D) f32

    # ----- pass 2: normalize row tiles -----
    x_map = lambda i: (i, 0)
    cm_map = lambda i: (0, 0)

    if mode == "PN":
        # mean_r ||x_r - mu||^2 == sum(x^2)/N - ||mu||^2 ; clamp at 0 to avoid
        # rsqrt(NaN) from catastrophic cancellation in f32.
        sumsq_total = jnp.sum(colsumsq_p)
        var = jnp.maximum(sumsq_total * (1.0 / n) - jnp.sum(col_mean * col_mean),
                          0.0)
        inv = (scale * lax.rsqrt(1e-6 + var)).reshape(1, 1).astype(jnp.float32)
        out = pl.pallas_call(
            _pn_apply_kernel,
            grid=(num_tiles,),
            in_specs=[pl.BlockSpec((bn, d), x_map),
                      pl.BlockSpec((1, d), cm_map),
                      pl.BlockSpec((1, 1), cm_map)],
            out_specs=pl.BlockSpec((bn, d), x_map),
            out_shape=jax.ShapeDtypeStruct((n, d), x.dtype),
            compiler_params=pltpu.CompilerParams(
                dimension_semantics=("parallel",)),
            cost_estimate=pl.CostEstimate(
                flops=2 * n * d, transcendentals=0,
                bytes_accessed=2 * n * d * itemsize + 4 * d),
        )(x, col_mean, inv)
    else:
        out = pl.pallas_call(
            functools.partial(_rownorm_apply_kernel, mode=mode, scale=scale),
            grid=(num_tiles,),
            in_specs=[pl.BlockSpec((bn, d), x_map),
                      pl.BlockSpec((1, d), cm_map)],
            out_specs=pl.BlockSpec((bn, d), x_map),
            out_shape=jax.ShapeDtypeStruct((n, d), x.dtype),
            compiler_params=pltpu.CompilerParams(
                dimension_semantics=("parallel",)),
            cost_estimate=pl.CostEstimate(
                flops=4 * n * d, transcendentals=n,
                bytes_accessed=2 * n * d * itemsize + 4 * d),
        )(x, col_mean)

    return out


# --------------------------------------------------------------------------
# Pure-JAX reference (mirrors the PyTorch module)
# --------------------------------------------------------------------------
def _pairnorm_ref(x, mode="PN", scale=1.0):
    if mode == "None":
        return x
    col_mean = x.mean(axis=0)
    if mode == "PN":
        xc = x - col_mean
        rownorm_mean = jnp.sqrt(1e-6 + (xc ** 2).sum(axis=1).mean())
        return scale * xc / rownorm_mean
    if mode == "PN-SI":
        xc = x - col_mean
        rownorm_ind = jnp.sqrt(1e-6 + (xc ** 2).sum(axis=1, keepdims=True))
        return scale * xc / rownorm_ind
    rownorm_ind = jnp.sqrt(1e-6 + (x ** 2).sum(axis=1, keepdims=True))
    return scale * x / rownorm_ind - col_mean


if __name__ == "__main__":
    failures = []

    def check(name, out, ref, tol=1e-5):
        if not jnp.allclose(out, ref, atol=tol, rtol=tol):
            err = float(jnp.max(jnp.abs(out.astype(jnp.float32)
                                        - ref.astype(jnp.float32))))
            failures.append(f"{name}: max abs err {err}")

    # 1) Small graph -> fused single-call path (all modes).
    x = jax.random.normal(jax.random.PRNGKey(0), (64, 32), dtype=jnp.float32)
    for mode in ["PN", "PN-SI", "PN-SCS", "None"]:
        out = jax.block_until_ready(pairnorm(x, mode=mode, scale=1.0))
        check(f"fused/{mode}", out, _pairnorm_ref(x, mode=mode, scale=1.0))

    # 2) Forced tiled path: 13 tiles of 16 rows (odd tile count -> exercises
    #    the clamped 2-way core split) + ragged last tile masking.
    x2 = jax.random.normal(jax.random.PRNGKey(1), (200, 32), dtype=jnp.float32)
    for mode in ["PN", "PN-SI", "PN-SCS"]:
        out = jax.block_until_ready(
            pairnorm(x2, mode=mode, scale=0.5, block_rows=16, allow_fused=False))
        check(f"tiled16/{mode}", out, _pairnorm_ref(x2, mode=mode, scale=0.5))

    # 3) N not a multiple of 8; ragged last tile of 11 rows, clipped output.
    x3 = jax.random.normal(jax.random.PRNGKey(2), (203, 32), dtype=jnp.float32)
    for mode in ["PN", "PN-SI"]:
        out = jax.block_until_ready(
            pairnorm(x3, mode=mode, scale=1.0, block_rows=48, allow_fused=False))
        check(f"tiled48/{mode}", out, _pairnorm_ref(x3, mode=mode, scale=1.0))

    # 4) Large enough to take the auto-sized tiled path on any generation.
    x4 = jax.random.normal(jax.random.PRNGKey(3), (4096, 384), dtype=jnp.float32)
    for mode in ["PN", "PN-SCS"]:
        out = jax.block_until_ready(pairnorm(x4, mode=mode, scale=1.0))
        check(f"auto/{mode}", out, _pairnorm_ref(x4, mode=mode, scale=1.0),
              tol=1e-4)

    if failures:
        for f in failures:
            print("mismatch:", f)
    else:
        print("KERNEL_OK")
</pallas_src>

<mosaic_0001>
module attributes {stable_mosaic.version = 11 : i64} {
  func.func @_fused_kernel(%arg0: memref<64x32xf32, #tpu.memory_space<vmem>>, %arg1: memref<64x32xf32, #tpu.memory_space<vmem>>) attributes {dimension_semantics = [], scalar_prefetch = 0 : i64, scratch_operands = 0 : i64, tpu.core_type = #tpu.core_type<tc>} {
    %c0 = arith.constant 0 : index
    %c0_0 = arith.constant 0 : index
    %0 = vector.load %arg0[%c0, %c0_0] : memref<64x32xf32, #tpu.memory_space<vmem>>, vector<64x32xf32>
    %cst = arith.constant dense<0.000000e+00> : vector<32xf32>
    %1 = vector.multi_reduction <add>, %0, %cst [0] : vector<64x32xf32> to vector<32xf32>
    %2 = vector.shape_cast %1 : vector<32xf32> to vector<1x32xf32>
    %cst_1 = arith.constant 1.562500e-02 : f32
    %3 = vector.broadcast %cst_1 : f32 to vector<1x32xf32>
    %4 = arith.mulf %2, %3 : vector<1x32xf32>
    %5 = vector.broadcast %4 : vector<1x32xf32> to vector<64x32xf32>
    %6 = arith.subf %0, %5 : vector<64x32xf32>
    %7 = arith.mulf %6, %6 : vector<64x32xf32>
    %8 = vector.shape_cast %7 : vector<64x32xf32> to vector<1x64x32xf32>
    %cst_2 = arith.constant dense<0.000000e+00> : vector<1xf32>
    %9 = vector.multi_reduction <add>, %8, %cst_2 [1, 2] : vector<1x64x32xf32> to vector<1xf32>
    %10 = vector.shape_cast %9 : vector<1xf32> to vector<1x1x1xf32>
    %11 = vector.extract %10[0, 0, 0] : f32 from vector<1x1x1xf32>
    %12 = vector.broadcast %11 : f32 to vector<1x1xf32>
    %cst_3 = arith.constant 1.562500e-02 : f32
    %13 = vector.broadcast %cst_3 : f32 to vector<1x1xf32>
    %14 = arith.mulf %12, %13 : vector<1x1xf32>
    %cst_4 = arith.constant 9.99999997E-7 : f32
    %15 = vector.broadcast %cst_4 : f32 to vector<1x1xf32>
    %16 = arith.addf %15, %14 : vector<1x1xf32>
    %17 = math.rsqrt %16 : vector<1x1xf32>
    %cst_5 = arith.constant 1.000000e+00 : f32
    %18 = vector.broadcast %cst_5 : f32 to vector<1x1xf32>
    %19 = arith.mulf %18, %17 : vector<1x1xf32>
    %20 = vector.broadcast %19 : vector<1x1xf32> to vector<64x32xf32>
    %21 = arith.mulf %6, %20 : vector<64x32xf32>
    %c0_6 = arith.constant 0 : index
    %c0_7 = arith.constant 0 : index
    %22 = vector.load %arg1[%c0_6, %c0_7] : memref<64x32xf32, #tpu.memory_space<vmem>>, vector<64x32xf32>
    tpu.vector_store %arg1[%c0_6, %c0_7], %21 {strides = array<i32>} : memref<64x32xf32, #tpu.memory_space<vmem>>, vector<64x32xf32>,
    return
  }
}

</mosaic_0001>

<llo_original>
// kernel: tpu_custom_call.1
$region0: #{tpu_custom_call.1}
  #allocation0 [shape = 'u32[]', space=smem, size = 0x4, offset = 0x4, fixed_abs, tag = 'smem constant byte address 0x4 - core index']
  #allocation1 [shape = 'u32[72,128]{1,0:T(1,128)}', space=vmem, size = 0x9000, scoped, tag = 'internal scratch']
  %s0 = inlined_call_operand.vmem [shape: f32[64,32], index: 0, kind: input, shape index: {}]
  %s1 = inlined_call_operand.vmem [shape: f32[64,32], index: 1, kind: output, shape index: {}]
  %s2 = sld [smem:[#allocation0]]
  $region14: #{tpu_custom_call.1} parent=0
    _
  %s4 = ssub.s32 1, %s2
  %s5 = scalar_select 0, %s4, %s2
  // Predicated region
  $region2: #{tpu_custom_call.1} parent=0 // pred_check
    _
  $region3: #{tpu_custom_call.1} parent=0 // pred_check_branch
    %7 = sbr.rel (0) target = $region5
  $region4: #{tpu_custom_call.1} parent=0 // pred_region
    _
  $region5: #{tpu_custom_call.1} parent=0 // pred_fallthru
    _
  %v8 = vld [vmem:[%s0] sm:$0xff]
  %v9 = vld [vmem:[%s0 + $0x8] sm:$0xff]
  %v10 = vld [vmem:[%s0 + $0x10] sm:$0xff]
  %v11 = vld [vmem:[%s0 + $0x18] sm:$0xff]
  %v12 = vld [vmem:[%s0 + $0x20] sm:$0xff]
  %v13 = vld [vmem:[%s0 + $0x28] sm:$0xff]
  %v14 = vld [vmem:[%s0 + $0x30] sm:$0xff]
  %v15 = vld [vmem:[%s0 + $0x38] sm:$0xff]
  %vm16 = vcmask 261120
  %v17 = vsel %vm16, %v8, 0.0
  %v18 = vsel %vm16, %v9, 0.0
  %v19 = vadd.f32 %v17, %v18
  %v20 = vsel %vm16, %v10, 0.0
  %v21 = vadd.f32 %v19, %v20
  %v22 = vsel %vm16, %v11, 0.0
  %v23 = vadd.f32 %v21, %v22
  %v24 = vsel %vm16, %v12, 0.0
  %v25 = vadd.f32 %v23, %v24
  %v26 = vsel %vm16, %v13, 0.0
  %v27 = vadd.f32 %v25, %v26
  %v28 = vsel %vm16, %v14, 0.0
  %v29 = vadd.f32 %v27, %v28
  %v30 = vsel %vm16, %v15, 0.0
  %v31 = vadd.f32 %v29, %v30
  %v32 = vrot.slane %v31, 4
  %v33 = vadd.f32 %v31, %v32
  %v34 = vrot.slane %v33, 2
  %v35 = vadd.f32 %v33, %v34
  %v36 = vrot.slane %v35, 1
  %v37 = vadd.f32 %v35, %v36
  %v38 = vmul.f32 %v37, 0.015625
  %v39 = vsub.f32 %v8, %v38
  %v40 = vsub.f32 %v9, %v38
  %v41 = vsub.f32 %v10, %v38
  %v42 = vsub.f32 %v11, %v38
  %v43 = vsub.f32 %v12, %v38
  %v44 = vsub.f32 %v13, %v38
  %v45 = vsub.f32 %v14, %v38
  %v46 = vsub.f32 %v15, %v38
  %v47 = vmul.f32 %v39, %v39
  %v48 = vmul.f32 %v40, %v40
  %v49 = vmul.f32 %v41, %v41
  %v50 = vmul.f32 %v42, %v42
  %v51 = vmul.f32 %v43, %v43
  %v52 = vmul.f32 %v44, %v44
  %v53 = vmul.f32 %v45, %v45
  %v54 = vmul.f32 %v46, %v46
  %v55 = vsel %vm16, %v47, 0.0
  %v56 = vsel %vm16, %v48, 0.0
  %v57 = vadd.f32 %v55, %v56
  %v58 = vsel %vm16, %v49, 0.0
  %v59 = vadd.f32 %v57, %v58
  %v60 = vsel %vm16, %v50, 0.0
  %v61 = vadd.f32 %v59, %v60
  %v62 = vsel %vm16, %v51, 0.0
  %v63 = vadd.f32 %v61, %v62
  %v64 = vsel %vm16, %v52, 0.0
  %v65 = vadd.f32 %v63, %v64
  %v66 = vsel %vm16, %v53, 0.0
  %v67 = vadd.f32 %v65, %v66
  %v68 = vsel %vm16, %v54, 0.0
  %v69 = vadd.f32 %v67, %v68
  %70 = vadd.xlane.f32.xlu0 %v69
  %v71 = vpop.xlane.xlu0 %70
  %v72 = vrot.slane %v71, 4
  %v73 = vadd.f32 %v71, %v72
  %v74 = vrot.slane %v73, 2
  %v75 = vadd.f32 %v73, %v74
  %v76 = vrot.slane %v75, 1
  %v77 = vadd.f32 %v75, %v76
  %s78 = vtos %v77
  %v79 = vstv %s78
  %v80 = vmul.f32 %v79, 0.015625
  %v81 = vadd.f32 %v80, 1e-06
  %v82 = vrsqrt.pop %v81
  %v83 = vmul.f32 %v82, %v81
  %v84 = vmul.f32 %v83, %v82
  %v85 = vmul.f32 0.5, %v84
  %v86 = vsub.f32 1.5, %v85
  %v87 = vmul.f32 %v82, %v86
  %vm88 = vweird.f32 %v81
  %vm89 = vweird.f32 %v82
  %vm90 = vmor %vm88, %vm89
  %v91 = vsel %vm90, %v82, %v87
  %v92 = vmul.f32 %v39, %v91
  %v93 = vmul.f32 %v40, %v91
  %v94 = vmul.f32 %v41, %v91
  %v95 = vmul.f32 %v42, %v91
  %v96 = vmul.f32 %v43, %v91
  %v97 = vmul.f32 %v44, %v91
  %v98 = vmul.f32 %v45, %v91
  %v99 = vmul.f32 %v46, %v91
  %100 = vst.msk [vmem:[%s1] sm:$0xff] %vm16, %v92
  %101 = vst.msk [vmem:[%s1 + $0x8] sm:$0xff] %vm16, %v93
  %102 = vst.msk [vmem:[%s1 + $0x10] sm:$0xff] %vm16, %v94
  %103 = vst.msk [vmem:[%s1 + $0x18] sm:$0xff] %vm16, %v95
  %104 = vst.msk [vmem:[%s1 + $0x20] sm:$0xff] %vm16, %v96
  %105 = vst.msk [vmem:[%s1 + $0x28] sm:$0xff] %vm16, %v97
  %106 = vst.msk [vmem:[%s1 + $0x30] sm:$0xff] %vm16, %v98
  %107 = vst.msk [vmem:[%s1 + $0x38] sm:$0xff] %vm16, %v99
  // Predicated region
  $region6: #{tpu_custom_call.1} parent=0 // pred_check
    _
  $region7: #{tpu_custom_call.1} parent=0 // pred_check_branch
    %109 = sbr.rel (0) target = $region9
  $region8: #{tpu_custom_call.1} parent=0 // pred_region
    _
  $region9: #{tpu_custom_call.1} parent=0 // pred_fallthru
    _
  // Predicated region
  $region10: #{tpu_custom_call.1} parent=0 // pred_check
    _
  $region11: #{tpu_custom_call.1} parent=0 // pred_check_branch
    %111 = sbr.rel (0) target = $region13
  $region12: #{tpu_custom_call.1} parent=0 // pred_region
    _
  $region13: #{tpu_custom_call.1} parent=0 // pred_fallthru
    _

</llo_original>
